<compile_context>
chip_gen: v5e
topology: v5e:2x2
jax: 0.10.0
libtpu: 0.0.40
codegen_flags: <defaults>
</compile_context>

<pallas_src>
from functools import partial

import jax
import jax.numpy as jnp
from jax.experimental import pallas as pl
from jax.experimental.pallas import tpu as pltpu


def _seq_logloss_kernel(nts_ref, ypred_ref, ytrue_ref, len_ref, out_ref, acc_ref,
                        *, eps, lagging, use_logits_form):
    """One (TB, TT) tile: masked log-loss folded into an (8, TT) accumulator.

    Grid = (nb, nt): axis 0 tiles the batch (parallel), axis 1 tiles the
    sequence (arbitrary, accumulated).  nts_ref (SMEM, scalar-prefetched) holds
    the number of sequence tiles that contain any unmasked column for each
    batch tile; tiles beyond it are skipped (no compute, no HBM DMA).
    out_ref is the per-batch-tile partial sum, written on the last seq step.
    """
    bi = pl.program_id(0)
    ti = pl.program_id(1)
    nt = pl.num_programs(1)
    TB, TT = ypred_ref.shape

    @pl.when(ti == 0)
    def _init():
        acc_ref[...] = jnp.zeros_like(acc_ref)

    @pl.when(ti < nts_ref[bi])
    def _compute():
        x = ypred_ref[...].astype(jnp.float32)
        yt = ytrue_ref[...].astype(jnp.float32)

        if use_logits_form:
            # Algebraically equal (eps -> 0): yt*log(p) + (1-yt)*log(1-p)
            #   = yt*x - softplus(x).  2 EUP pushes/elem instead of 3-4.
            softplus = jnp.maximum(x, 0.0) + jnp.log1p(jnp.exp(-jnp.abs(x)))
            logloss = yt * x - softplus
        else:
            p = jax.nn.sigmoid(x)
            logloss = yt * jnp.log(p + eps) + (1.0 - yt) * jnp.log(1.0 - p + eps)

        # mask[b, t_global] = t_global < lengths[b] - lagging  (global column!)
        limit = len_ref[...] - jnp.int32(lagging)                      # (TB, 1)
        col = ti * TT + jax.lax.broadcasted_iota(jnp.int32, (TB, TT), 1)
        masked = jnp.where(col < limit, logloss, 0.0)

        # Fold the batch-tile rows into an (8, TT) accumulator: leading-axis
        # split + sum keeps the minor (8,128) tile intact -> pure VPU adds.
        if TB % 8 == 0 and TB > 8:
            acc_ref[...] += masked.reshape(TB // 8, 8, TT).sum(axis=0)
        else:
            acc_ref[...] += masked

    @pl.when(ti == nt - 1)
    def _finalize():
        s = jnp.sum(acc_ref[...])
        out_ref[...] = jnp.full(out_ref.shape, s, jnp.float32)


def _pick_batch_block(B, candidates=(256, 128, 64, 32, 16, 8)):
    """Largest candidate dividing B that still leaves >= 2 batch tiles
    (keeps both v7x TensorCores busy); else any divisor; else the full dim."""
    divs = [c for c in candidates if B % c == 0]
    for c in divs:
        if B // c >= 2:
            return c
    return divs[0] if divs else B


def _pick_seq_block(T, tb, itemsize,
                    candidates=(4096, 2048, 1024, 512, 256, 128),
                    budget_bytes=24 * 1024 * 1024):
    """Largest candidate dividing T whose pipelined footprint fits the budget
    (2 inputs x double-buffer x tile + (8, tt) f32 accumulator)."""
    divs = [c for c in candidates if T % c == 0]
    if not divs:
        return T  # TODO(synk): pad pathological prime T in the wrapper if needed.
    for c in divs:
        if 2 * 2 * tb * c * itemsize + 8 * c * 4 <= budget_bytes:
            return c
    return divs[-1]


def seq_log_loss(y_pred, y_true, lengths, *, lagging, eps=1e-7,
                 block_b=None, block_t=None, use_logits_form=False):
    """Pallas implementation of SeqLogLoss.forward. Returns a scalar f32.

    Inputs may be f32 or bf16 (bf16 halves HBM traffic; kernel upcasts
    in-register).  Labels in {0,1} are exact in bf16.
    """
    B, T = y_pred.shape
    lengths = jnp.asarray(lengths, dtype=jnp.int32)
    lengths2d = lengths.reshape(B, 1)

    itemsize = max(jnp.dtype(y_pred.dtype).itemsize, jnp.dtype(y_true.dtype).itemsize)
    tb = block_b if block_b is not None else _pick_batch_block(B)
    tt = block_t if block_t is not None else _pick_seq_block(T, tb, itemsize)
    assert B % tb == 0 and T % tt == 0, "block sizes must divide (B, T)"
    nb, nt = B // tb, T // tt

    # Per-batch-tile count of sequence tiles containing any unmasked column.
    # Prefetched to SMEM: gates compute and clamps the input index_maps so the
    # pipeliner skips HBM DMAs for fully-masked (padding) tiles.
    limits = jnp.maximum(lengths - jnp.int32(lagging), 0)
    tile_max = jnp.max(limits.reshape(nb, tb), axis=1)
    nts = ((tile_max + (tt - 1)) // tt).astype(jnp.int32)          # (nb,)

    acc_rows = 8 if tb % 8 == 0 else tb
    kernel = partial(_seq_logloss_kernel, eps=float(eps), lagging=int(lagging),
                     use_logits_form=bool(use_logits_form))

    def _in_map(bi, ti, nts_ref):
        # Clamp to the last needed tile: trailing (skipped) steps repeat the
        # previous block index, so no new HBM DMA is issued for them.
        return (bi, jnp.minimum(ti, jnp.maximum(nts_ref[bi] - 1, 0)))

    partials = pl.pallas_call(
        kernel,
        out_shape=jax.ShapeDtypeStruct((nb, 8, 128), jnp.float32),
        grid_spec=pltpu.PrefetchScalarGridSpec(
            num_scalar_prefetch=1,
            grid=(nb, nt),
            in_specs=[
                pl.BlockSpec((tb, tt), _in_map),                       # y_pred tile
                pl.BlockSpec((tb, tt), _in_map),                       # y_true tile
                pl.BlockSpec((tb, 1), lambda bi, ti, nts_ref: (bi, 0)),  # lengths col
            ],
            out_specs=pl.BlockSpec((1, 8, 128), lambda bi, ti, nts_ref: (bi, 0, 0)),
            scratch_shapes=[pltpu.VMEM((acc_rows, tt), jnp.float32)],
        ),
        compiler_params=pltpu.CompilerParams(
            dimension_semantics=("parallel", "arbitrary"),
            vmem_limit_bytes=32 * 1024 * 1024,   # safe on v5e/v6e/v7x
        ),
    )(nts, y_pred, y_true, lengths2d)

    masked_sum = jnp.sum(partials[:, 0, 0])
    # total and the normalization are hoisted out of the kernel.
    total = (jnp.sum(lengths) - jnp.int32(lagging) * jnp.int32(B)).astype(jnp.float32)
    return -masked_sum / total


def _reference(y_pred, y_true, lengths, *, lagging, eps=1e-7):
    """Pure-JAX reference mirroring the PyTorch forward."""
    B, T = y_pred.shape
    p = jax.nn.sigmoid(y_pred.astype(jnp.float32))
    yt = y_true.astype(jnp.float32)
    logloss = yt * jnp.log(p + eps) + (1 - yt) * jnp.log(1 - p + eps)
    col = jnp.arange(T)[None, :]
    mask = (col < (jnp.asarray(lengths)[:, None] - lagging)).astype(jnp.float32)
    total = jnp.sum(jnp.asarray(lengths)) - lagging * B
    return -(logloss * mask).sum() / total


if __name__ == "__main__":
    key = jax.random.PRNGKey(0)
    k1, k2, k3, k4, k5 = jax.random.split(key, 5)
    lagging = 2

    # --- Test 1: small shapes, single block (grid (1, 1)), tb < 8 path. ---
    B, T = 2, 16
    y_pred = jax.random.normal(k1, (B, T), dtype=jnp.float32)            # logits
    y_true = (jax.random.uniform(k2, (B, T)) > 0.5).astype(jnp.float32)  # labels
    lengths = jnp.array([10, 14], dtype=jnp.int32)

    loss = jax.block_until_ready(seq_log_loss(y_pred, y_true, lengths, lagging=lagging))
    ref = _reference(y_pred, y_true, lengths, lagging=lagging)
    assert jnp.allclose(loss, ref, rtol=1e-5, atol=1e-5), (loss, ref)

    # --- Test 2: tiled grid, (8, tt) accumulator fold, and tile skipping. ---
    # Batch tile 0 (rows 0..15) has short sequences -> only 1 of 4 seq tiles
    # is ever fetched/computed for it; batch tile 1 uses full-range lengths.
    B2, T2 = 32, 512
    y_pred2 = jax.random.normal(k3, (B2, T2), dtype=jnp.float32)
    y_true2 = (jax.random.uniform(k4, (B2, T2)) > 0.5).astype(jnp.float32)
    lengths2 = jnp.concatenate([
        jnp.array([lagging, lagging + 1, 5, 17, 40, 64, 100, 128,
                   3, 9, 30, 50, 77, 90, 110, 120], dtype=jnp.int32),
        jax.random.randint(k5, (16,), minval=lagging + 1, maxval=T2 + 1,
                           dtype=jnp.int32),
    ])

    loss2 = jax.block_until_ready(
        seq_log_loss(y_pred2, y_true2, lengths2, lagging=lagging,
                     block_b=16, block_t=128))   # grid (2, 4), fold 16 -> 8 rows
    ref2 = _reference(y_pred2, y_true2, lengths2, lagging=lagging)
    assert jnp.allclose(loss2, ref2, rtol=1e-5, atol=1e-5), (loss2, ref2)

    # --- Test 3: bf16 inputs (halved HBM traffic path); ref on same bf16. ---
    yp_bf16 = y_pred2.astype(jnp.bfloat16)
    yt_bf16 = y_true2.astype(jnp.bfloat16)
    loss3 = jax.block_until_ready(
        seq_log_loss(yp_bf16, yt_bf16, lengths2, lagging=lagging,
                     block_b=16, block_t=128))
    ref3 = _reference(yp_bf16, yt_bf16, lengths2, lagging=lagging)
    assert jnp.allclose(loss3, ref3, rtol=1e-5, atol=1e-5), (loss3, ref3)

    # --- Test 4: opt-in BCE-with-logits form (2 EUP pushes/elem, v7x). ---
    loss4 = jax.block_until_ready(
        seq_log_loss(y_pred2, y_true2, lengths2, lagging=lagging,
                     block_b=16, block_t=128, use_logits_form=True))
    assert jnp.allclose(loss4, ref2, rtol=1e-4, atol=1e-4), (loss4, ref2)

    print("KERNEL_OK")
</pallas_src>

<mosaic_0001>
module attributes {stable_mosaic.version = 11 : i64} {
  func.func @_seq_logloss_kernel(%arg0: i32, %arg1: i32, %arg2: memref<1xi32, #tpu.memory_space<smem>>, %arg3: memref<2x16xf32, #tpu.memory_space<vmem>>, %arg4: memref<2x16xf32, #tpu.memory_space<vmem>>, %arg5: memref<2x1xi32, #tpu.memory_space<vmem>>, %arg6: memref<1x8x128xf32, #tpu.memory_space<vmem>>, %arg7: memref<2x16xf32, #tpu.memory_space<vmem>>) attributes {dimension_semantics = [#tpu.dimension_semantics<parallel>, #tpu.dimension_semantics<arbitrary>], iteration_bounds = array<i64: 1, 1>, scalar_prefetch = 1 : i64, scratch_operands = 1 : i64, tpu.core_type = #tpu.core_type<tc>, window_params = [{transform_indices = @transform_0, window_bounds = array<i64: 2, 16>}, {transform_indices = @transform_1, window_bounds = array<i64: 2, 16>}, {transform_indices = @transform_2, window_bounds = array<i64: 2, 1>}, {transform_indices = @transform_3, window_bounds = array<i64: 1, 8, 128>}]} {
    %c0_i32 = arith.constant 0 : i32
    %0 = arith.cmpi eq, %arg1, %c0_i32 : i32
    %1 = arith.extui %0 : i1 to i32
    %c0_i32_0 = arith.constant 0 : i32
    %2 = arith.cmpi ne, %1, %c0_i32_0 : i32
    scf.if %2 {
      %cst = arith.constant 0.000000e+00 : f32
      %11 = vector.broadcast %cst : f32 to vector<2x16xf32>
      %c0 = arith.constant 0 : index
      %c0_4 = arith.constant 0 : index
      %12 = vector.load %arg7[%c0, %c0_4] : memref<2x16xf32, #tpu.memory_space<vmem>>, vector<2x16xf32>
      tpu.vector_store %arg7[%c0, %c0_4], %11 {strides = array<i32>} : memref<2x16xf32, #tpu.memory_space<vmem>>, vector<2x16xf32>,
    } else {
    }
    %3 = arith.index_cast %arg0 : i32 to index
    %4 = memref.load %arg2[%3] : memref<1xi32, #tpu.memory_space<smem>>
    %5 = arith.cmpi slt, %arg1, %4 : i32
    %6 = arith.extui %5 : i1 to i32
    %c0_i32_1 = arith.constant 0 : i32
    %7 = arith.cmpi ne, %6, %c0_i32_1 : i32
    scf.if %7 {
      %c0 = arith.constant 0 : index
      %c0_4 = arith.constant 0 : index
      %11 = vector.load %arg3[%c0, %c0_4] : memref<2x16xf32, #tpu.memory_space<vmem>>, vector<2x16xf32>
      %c0_5 = arith.constant 0 : index
      %c0_6 = arith.constant 0 : index
      %12 = vector.load %arg4[%c0_5, %c0_6] : memref<2x16xf32, #tpu.memory_space<vmem>>, vector<2x16xf32>
      %13 = arith.negf %11 : vector<2x16xf32>
      %14 = math.exp %13 : vector<2x16xf32>
      %cst = arith.constant 1.000000e+00 : f32
      %15 = vector.broadcast %cst : f32 to vector<2x16xf32>
      %16 = arith.addf %15, %14 : vector<2x16xf32>
      %17 = arith.divf %15, %16 : vector<2x16xf32>
      %cst_7 = arith.constant 1.000000e-07 : f32
      %18 = vector.broadcast %cst_7 : f32 to vector<2x16xf32>
      %19 = arith.addf %17, %18 : vector<2x16xf32>
      %20 = math.log %19 : vector<2x16xf32>
      %21 = arith.mulf %12, %20 : vector<2x16xf32>
      %cst_8 = arith.constant 1.000000e+00 : f32
      %22 = vector.broadcast %cst_8 : f32 to vector<2x16xf32>
      %23 = arith.subf %22, %12 : vector<2x16xf32>
      %cst_9 = arith.constant 1.000000e+00 : f32
      %24 = vector.broadcast %cst_9 : f32 to vector<2x16xf32>
      %25 = arith.subf %24, %17 : vector<2x16xf32>
      %cst_10 = arith.constant 1.000000e-07 : f32
      %26 = vector.broadcast %cst_10 : f32 to vector<2x16xf32>
      %27 = arith.addf %25, %26 : vector<2x16xf32>
      %28 = math.log %27 : vector<2x16xf32>
      %29 = arith.mulf %23, %28 : vector<2x16xf32>
      %30 = arith.addf %21, %29 : vector<2x16xf32>
      %c0_11 = arith.constant 0 : index
      %c0_12 = arith.constant 0 : index
      %31 = vector.load %arg5[%c0_11, %c0_12] : memref<2x1xi32, #tpu.memory_space<vmem>>, vector<2x1xi32>
      %c2_i32 = arith.constant 2 : i32
      %32 = vector.broadcast %c2_i32 : i32 to vector<2x1xi32>
      %33 = arith.subi %31, %32 : vector<2x1xi32>
      %c16_i32 = arith.constant 16 : i32
      %34 = arith.muli %arg1, %c16_i32 : i32
      %35 = tpu.iota {dimensions = array<i32: 1>} : vector<2x16xi32>
      %36 = vector.broadcast %34 : i32 to vector<2x16xi32>
      %37 = arith.addi %36, %35 : vector<2x16xi32>
      %38 = vector.broadcast %33 : vector<2x1xi32> to vector<2x16xi32>
      %39 = arith.cmpi slt, %37, %38 : vector<2x16xi32>
      %cst_13 = arith.constant 0.000000e+00 : f32
      %40 = vector.broadcast %cst_13 : f32 to vector<2x16xf32>
      %41 = arith.select %39, %30, %40 : vector<2x16xi1>, vector<2x16xf32>
      %c0_14 = arith.constant 0 : index
      %c0_15 = arith.constant 0 : index
      %42 = vector.load %arg7[%c0_14, %c0_15] : memref<2x16xf32, #tpu.memory_space<vmem>>, vector<2x16xf32>
      %43 = arith.addf %42, %41 : vector<2x16xf32>
      %c0_16 = arith.constant 0 : index
      %c0_17 = arith.constant 0 : index
      %44 = vector.load %arg7[%c0_16, %c0_17] : memref<2x16xf32, #tpu.memory_space<vmem>>, vector<2x16xf32>
      tpu.vector_store %arg7[%c0_16, %c0_17], %43 {strides = array<i32>} : memref<2x16xf32, #tpu.memory_space<vmem>>, vector<2x16xf32>,
    } else {
    }
    %c0_i32_2 = arith.constant 0 : i32
    %8 = arith.cmpi eq, %arg1, %c0_i32_2 : i32
    %9 = arith.extui %8 : i1 to i32
    %c0_i32_3 = arith.constant 0 : i32
    %10 = arith.cmpi ne, %9, %c0_i32_3 : i32
    scf.if %10 {
      %c0 = arith.constant 0 : index
      %c0_4 = arith.constant 0 : index
      %11 = vector.load %arg7[%c0, %c0_4] : memref<2x16xf32, #tpu.memory_space<vmem>>, vector<2x16xf32>
      %12 = vector.shape_cast %11 : vector<2x16xf32> to vector<1x2x16xf32>
      %cst = arith.constant dense<0.000000e+00> : vector<1xf32>
      %13 = vector.multi_reduction <add>, %12, %cst [1, 2] : vector<1x2x16xf32> to vector<1xf32>
      %14 = vector.shape_cast %13 : vector<1xf32> to vector<1x1x1xf32>
      %15 = vector.extract %14[0, 0, 0] : f32 from vector<1x1x1xf32>
      %16 = vector.broadcast %15 : f32 to vector<1x8x128xf32>
      %c0_5 = arith.constant 0 : index
      %c0_6 = arith.constant 0 : index
      %c0_7 = arith.constant 0 : index
      %17 = vector.load %arg6[%c0_5, %c0_6, %c0_7] : memref<1x8x128xf32, #tpu.memory_space<vmem>>, vector<1x8x128xf32>
      tpu.vector_store %arg6[%c0_5, %c0_6, %c0_7], %16 {strides = array<i32>} : memref<1x8x128xf32, #tpu.memory_space<vmem>>, vector<1x8x128xf32>,
    } else {
    }
    return
  }
  func.func @transform_0(%arg0: i32, %arg1: i32, %arg2: memref<1xi32, #tpu.memory_space<smem>>) -> (i32, i32) {
    %0 = arith.index_cast %arg0 : i32 to index
    %1 = memref.load %arg2[%0] : memref<1xi32, #tpu.memory_space<smem>>
    %c1_i32 = arith.constant 1 : i32
    %2 = arith.subi %1, %c1_i32 : i32
    %c0_i32 = arith.constant 0 : i32
    %3 = arith.maxsi %2, %c0_i32 : i32
    %4 = arith.minsi %arg1, %3 : i32
    %c0_i32_0 = arith.constant 0 : i32
    return %arg0, %4 : i32, i32
  }
  func.func @transform_1(%arg0: i32, %arg1: i32, %arg2: memref<1xi32, #tpu.memory_space<smem>>) -> (i32, i32) {
    %0 = arith.index_cast %arg0 : i32 to index
    %1 = memref.load %arg2[%0] : memref<1xi32, #tpu.memory_space<smem>>
    %c1_i32 = arith.constant 1 : i32
    %2 = arith.subi %1, %c1_i32 : i32
    %c0_i32 = arith.constant 0 : i32
    %3 = arith.maxsi %2, %c0_i32 : i32
    %4 = arith.minsi %arg1, %3 : i32
    %c0_i32_0 = arith.constant 0 : i32
    return %arg0, %4 : i32, i32
  }
  func.func @transform_2(%arg0: i32, %arg1: i32, %arg2: memref<1xi32, #tpu.memory_space<smem>>) -> (i32, i32) {
    %c0_i32 = arith.constant 0 : i32
    %c0_i32_0 = arith.constant 0 : i32
    return %arg0, %c0_i32 : i32, i32
  }
  func.func @transform_3(%arg0: i32, %arg1: i32, %arg2: memref<1xi32, #tpu.memory_space<smem>>) -> (i32, i32, i32) {
    %c0_i32 = arith.constant 0 : i32
    %c0_i32_0 = arith.constant 0 : i32
    %c0_i32_1 = arith.constant 0 : i32
    return %arg0, %c0_i32, %c0_i32_0 : i32, i32, i32
  }
}

</mosaic_0001>

<llo_original>
// kernel: tpu_custom_call.1
$region0: #{tpu_custom_call.1}
  #allocation0 [shape = 'u32[]', space=smem, size = 0x4, offset = 0x4, fixed_abs, tag = 'smem constant byte address 0x4 - core index']
  #allocation1 [shape = 'u32[72,128]{1,0:T(1,128)}', space=vmem, size = 0x9000, scoped, tag = 'internal scratch']
  #allocation2 [shape = 'f32[2,16]{1,0:T(2,128)}', space=vmem, size = 0x400, scoped, tag = 'scratch operand']
  #allocation3 [shape = 's32[1]{0}', space=sflag, size = 0x4, scoped, tag = 'scoped memory for tpu_custom_call.1']
  #allocation4 [shape = 's32[1]{0:T(128)S(6)}', space=smem, size = 0x200, scoped, tag = 'prefetched SMEM operand 0']
  %s0 = inlined_call_operand.<no memory space> [shape: s32[1], index: 0, kind: input, shape index: {}]
  %s1 = inlined_call_operand.vmem [shape: f32[2,16], index: 1, kind: input, shape index: {}]
  %s2 = inlined_call_operand.vmem [shape: f32[2,16], index: 2, kind: input, shape index: {}]
  %s3 = inlined_call_operand.vmem [shape: s32[2,1], index: 3, kind: input, shape index: {}]
  %s4 = inlined_call_operand.hbm [shape: f32[1,8,128], index: 4, kind: output, shape index: {}]
  %s5 = sld [smem:[#allocation0]]
  $region34: #{tpu_custom_call.1} parent=0
    _
  %s7 = ssub.s32 1, %s5
  %s8 = scalar_select 0, %s7, %s5
  %9 = sst [smem:[#allocation4]] %s0
  $region1: #{tpu_custom_call.1} parent=0
    #allocation5 [shape = 'u8[4096]{0}', space=vmem, size = 0x1000, scoped, tag = 'output window, operand 0, single buffered']
    #allocation6 [shape = 's32[1]{0}', space=sflag, size = 0x4, scoped, tag = 'scoped memory for tpu_custom_call.1']
    %10 = vsyncpa [#allocation6], 0
    // Predicated region
    $region2: #{tpu_custom_call.1} parent=1 // pred_check
      _
    $region3: #{tpu_custom_call.1} parent=1 // pred_check_branch
      %12 = sbr.rel (0) target = $region5
    $region4: #{tpu_custom_call.1} parent=1 // pred_region
      %s13 = sld [smem:[#allocation4]]
      %s14 = ssub.s32 %s13, 1
      %p15 = scmp.gt.s32.totalorder %s14, 0
      %s16 = scalar_select %p15, %s14, 0
      %p17 = scmp.lt.s32.totalorder 0, %s16
      %s18 = scalar_select %p17, 0, %s16
      %p19 = scmp.lt.s32.totalorder %s18, 0
      %s20 = scalar_select %p19, %s18, 0
      %s21 = smul.addr %s20, 2
      %s22 = scalar_lea.vmem %s1, %s21
      %s23 = sld [smem:[#allocation4]]
      %s24 = ssub.s32 %s23, 1
      %p25 = scmp.gt.s32.totalorder %s24, 0
      %s26 = scalar_select %p25, %s24, 0
      %p27 = scmp.lt.s32.totalorder 0, %s26
      %s28 = scalar_select %p27, 0, %s26
    $region5: #{tpu_custom_call.1} parent=1 // pred_fallthru
      _
    // Predicated region
    $region6: #{tpu_custom_call.1} parent=1 // pred_check
      _
    $region7: #{tpu_custom_call.1} parent=1 // pred_check_branch
      %30 = sbr.rel (0) target = $region9
    $region8: #{tpu_custom_call.1} parent=1 // pred_region
      %s31 = sld [smem:[#allocation4]]
      %s32 = ssub.s32 %s31, 1
      %p33 = scmp.gt.s32.totalorder %s32, 0
      %s34 = scalar_select %p33, %s32, 0
      %p35 = scmp.lt.s32.totalorder 0, %s34
      %s36 = scalar_select %p35, 0, %s34
      %p37 = scmp.lt.s32.totalorder %s36, 0
      %s38 = scalar_select %p37, %s36, 0
      %s39 = smul.addr %s38, 2
      %s40 = scalar_lea.vmem %s2, %s39
      %s41 = sld [smem:[#allocation4]]
      %s42 = ssub.s32 %s41, 1
      %p43 = scmp.gt.s32.totalorder %s42, 0
      %s44 = scalar_select %p43, %s42, 0
      %p45 = scmp.lt.s32.totalorder 0, %s44
      %s46 = scalar_select %p45, 0, %s44
    $region9: #{tpu_custom_call.1} parent=1 // pred_fallthru
      _
    // Predicated region
    $region10: #{tpu_custom_call.1} parent=1 // pred_check
      _
    $region11: #{tpu_custom_call.1} parent=1 // pred_check_branch
      %48 = sbr.rel (0) target = $region13
    $region12: #{tpu_custom_call.1} parent=1 // pred_region
      _
    $region13: #{tpu_custom_call.1} parent=1 // pred_fallthru
      _
    %s49 = sld [smem:[#allocation4]]
    %s50 = ssub.s32 %s49, 1
    %p51 = scmp.gt.s32.totalorder %s50, 0
    %s52 = scalar_select %p51, %s50, 0
    %p53 = scmp.lt.s32.totalorder 0, %s52
    %s54 = scalar_select %p53, 0, %s52
    %p55 = scmp.lt.s32.totalorder %s54, 0
    %s56 = scalar_select %p55, %s54, 0
    %s57 = smul.addr %s56, 2
    %s58 = scalar_lea.vmem %s1, %s57
    %s59 = sld [smem:[#allocation4]]
    %s60 = ssub.s32 %s59, 1
    %p61 = scmp.gt.s32.totalorder %s60, 0
    %s62 = scalar_select %p61, %s60, 0
    %p63 = scmp.lt.s32.totalorder 0, %s62
    %s64 = scalar_select %p63, 0, %s62
    %p65 = scmp.lt.s32.totalorder %s64, 0
    %s66 = scalar_select %p65, %s64, 0
    %s67 = smul.addr %s66, 2
    %s68 = scalar_lea.vmem %s2, %s67
    %s69 = sld [smem:[#allocation4]]
    %s70 = ssub.s32 %s69, 1
    %p71 = scmp.gt.s32.totalorder %s70, 0
    %s72 = scalar_select %p71, %s70, 0
    %p73 = scmp.lt.s32.totalorder 0, %s72
    %s74 = scalar_select %p73, 0, %s72
    %p75 = scmp.lt.s32.totalorder %s74, 0
    %s76 = scalar_select %p75, %s74, 0
    %s77 = smul.addr %s76, 2
    %s78 = scalar_lea.vmem %s1, %s77
    %s79 = sld [smem:[#allocation4]]
    %s80 = ssub.s32 %s79, 1
    %p81 = scmp.gt.s32.totalorder %s80, 0
    %s82 = scalar_select %p81, %s80, 0
    %p83 = scmp.lt.s32.totalorder 0, %s82
    %s84 = scalar_select %p83, 0, %s82
    %s85 = sld [smem:[#allocation4]]
    %s86 = ssub.s32 %s85, 1
    %p87 = scmp.gt.s32.totalorder %s86, 0
    %s88 = scalar_select %p87, %s86, 0
    %p89 = scmp.lt.s32.totalorder 0, %s88
    %s90 = scalar_select %p89, 0, %s88
    %p91 = scmp.lt.s32.totalorder %s90, 0
    %s92 = scalar_select %p91, %s90, 0
    %s93 = smul.addr %s92, 2
    %s94 = scalar_lea.vmem %s2, %s93
    %s95 = sld [smem:[#allocation4]]
    %s96 = ssub.s32 %s95, 1
    %p97 = scmp.gt.s32.totalorder %s96, 0
    %s98 = scalar_select %p97, %s96, 0
    %p99 = scmp.lt.s32.totalorder 0, %s98
    %s100 = scalar_select %p99, 0, %s98
    %p101 = scmp.eq.s32.totalorder 0, 0
    // Predicated region
    $region14: #{tpu_custom_call.1} parent=1 // pred_check
      %p102 = pneg %p101
    $region15: #{tpu_custom_call.1} parent=1 // pred_check_branch
      %104 = sbr.rel (%p102) target = $region17
    $region16: #{tpu_custom_call.1} parent=1 // pred_region
      %vm105 = vcmask 123904
      %106 = vst.msk [vmem:[#allocation2] sm:$0x3] %vm105, 0.0
    $region17: #{tpu_custom_call.1} parent=1 // pred_fallthru
      _
    %s107 = sld [smem:[#allocation4]]
    %p108 = scmp.lt.s32.totalorder 0, %s107
    // Predicated region
    $region18: #{tpu_custom_call.1} parent=1 // pred_check
      %p109 = pneg %p108
    $region19: #{tpu_custom_call.1} parent=1 // pred_check_branch
      %111 = sbr.rel (%p109) target = $region21
    $region20: #{tpu_custom_call.1} parent=1 // pred_region
      %v112 = vld [vmem:[%s78] sm:$0x3]
      %v113 = vld [vmem:[%s94] sm:$0x3]
      %v114 = vxor.u32 %v112, 2147483648
      %v115 = vmul.f32 %v114, 1.442695
      %v116 = vpow.pop %v115
      %v117 = vadd.f32 %v116, 1.0
      %v118 = vrcp.pop %v117
      %v119 = vmul.f32 %v117, %v118
      %v120 = vsub.f32 1.0, %v119
      %v121 = vmul.f32 %v118, %v120
      %v122 = vadd.f32 %v118, %v121
      %vm123 = vweird.f32 %v117
      %vm124 = vweird.f32 %v118
      %vm125 = vmor %vm123, %vm124
      %v126 = vsel %vm125, %v118, %v122
      %v127 = vand.u32 2147483647, %v117
      %vm128 = vcmp.eq.f32.partialorder %v127, 8.507059e+37
      %v129 = vand.u32 %v117, 2147483648
      %v130 = vor.u32 1.1754944e-38, %v129
      %v131 = vsel %vm128, %v130, %v126
      %v132 = vmul.f32 1.0, %v131
      %v133 = vadd.f32 %v132, 1e-07
      %v134 = vlog2.pop %v133
      %v135 = vmul.f32 %v134, 0.6931472
      %v136 = vmul.f32 %v113, %v135
      %v137 = vsub.f32 1.0, %v113
      %v138 = vsub.f32 1.0, %v132
      %v139 = vadd.f32 %v138, 1e-07
      %v140 = vlog2.pop %v139
      %v141 = vmul.f32 %v140, 0.6931472
      %v142 = vmul.f32 %v137, %v141
      %v143 = vadd.f32 %v136, %v142
      %v144 = vld [vmem:[%s3] sm:$0x3]
      %v145 = vsub.s32 %v144, 2
      %s146 = smul.u32 0, 16
      %v147 = vlaneseq
      %v148 = vand.u32 %v147, 127
      %v149 = vstv %s146
      %v150 = vadd.s32 %v149, %v148
      %151 = vset.pattern.permute.xlu0 0
      %152 = vperm.xlu0 %151, %v145
      %v153 = vpop.permute.xlu0 %152
      %vm154 = vcmp.lt.s32.totalorder %v150, %v153
      %v155 = vsel %vm154, %v143, 0.0
      %v156 = vld [vmem:[#allocation2] sm:$0x3]
      %v157 = vadd.f32 %v156, %v155
      %vm158 = vcmask 123904
      %159 = vst.msk [vmem:[#allocation2] sm:$0x3] %vm158, %v157
    $region21: #{tpu_custom_call.1} parent=1 // pred_fallthru
      _
    // Predicated region
    $region22: #{tpu_custom_call.1} parent=1 // pred_check
      %p160 = pneg %p101
    $region23: #{tpu_custom_call.1} parent=1 // pred_check_branch
      %162 = sbr.rel (%p160) target = $region25
    $region24: #{tpu_custom_call.1} parent=1 // pred_region
      %v163 = vld [vmem:[#allocation2] sm:$0x3]
      %vm164 = vcmask 123904
      %v165 = vsel %vm164, %v163, 0.0
      %166 = vadd.xlane.f32.xlu0 %v165
      %v167 = vpop.xlane.xlu0 %166
      %v168 = vrot.slane %v167, 4
      %v169 = vadd.f32 %v167, %v168
      %v170 = vrot.slane %v169, 2
      %v171 = vadd.f32 %v169, %v170
      %v172 = vrot.slane %v171, 1
      %v173 = vadd.f32 %v171, %v172
      %s174 = vtos %v173
      %v175 = vstv %s174
      %176 = vst [vmem:[#allocation5] sm:$0xff] %v175
    $region25: #{tpu_custom_call.1} parent=1 // pred_fallthru
      _
    // Predicated region
    $region26: #{tpu_custom_call.1} parent=1 // pred_check
      _
    $region27: #{tpu_custom_call.1} parent=1 // pred_check_branch
      %178 = sbr.rel (0) target = $region29
    $region28: #{tpu_custom_call.1} parent=1 // pred_region
      %180 = vsyncadd [#allocation6], 0
      %s182 = sshll.u32 [#allocation5], 4
      %s183 = int_to_ptr.vmem [resolvable:$true] %s182
      %s184 = sshll.u32 %s4, 4
      %s185 = int_to_ptr.hbm [resolvable:$true] %s184
      %187 = dma.vmem_to_hbm [thread:$0]  %s183, 128, %s185, [#allocation6]
    $region29: #{tpu_custom_call.1} parent=1 // pred_fallthru
      _
    // Predicated region
    $region30: #{tpu_custom_call.1} parent=1 // pred_check
      _
    $region31: #{tpu_custom_call.1} parent=1 // pred_check_branch
      %189 = sbr.rel (0) target = $region33
    $region32: #{tpu_custom_call.1} parent=1 // pred_region
      %191 = dma.done [#allocation6], 128
    $region33: #{tpu_custom_call.1} parent=1 // pred_fallthru
      _
    %192 = vsyncpa [#allocation6], 1

</llo_original>
